<compile_context>
chip_gen: v7x
topology: tpu7x:2x2x1
jax: 0.10.0
libtpu: 0.0.40
codegen_flags: <defaults>
</compile_context>

<pallas_src>
import math
import functools
import numpy as np
import jax
import jax.numpy as jnp
from jax import lax
from jax.experimental import pallas as pl
from jax.experimental.pallas import tpu as pltpu

Y_SCALE = 255.0   # normalisation scale for the back-projected y coordinate
LANE = 128        # TPU lane width
SUBLANE = 8


def _round_up(n, m):
    return ((n + m - 1) // m) * m


# ---------------------------------------------------------------------------
# Pallas kernel: square activation + row mask + weighted y-moments (VPU only)
# ---------------------------------------------------------------------------
def _wls_kernel(theta_ref, w_ref, masked_ref, mom_ref, *,
                ncls, s_tile, img_w, hw, zero_rows):
    b = pl.program_id(0)          # batch     (parallel)
    t = pl.program_id(1)          # HW tile   (arbitrary / reduction)

    # ---- synthesize (row, col) image coordinates of this flattened (s_tile,128) slab
    si = lax.broadcasted_iota(jnp.int32, (s_tile, LANE), 0)
    li = lax.broadcasted_iota(jnp.int32, (s_tile, LANE), 1)
    p = (t * s_tile + si) * LANE + li                  # flat index into padded H*W
    pf = p.astype(jnp.float32)
    # exact integer division for p < 2**23 (asserted in the wrapper)
    rowf = jnp.floor((pf + 0.5) * (1.0 / img_w))
    colf = pf - rowf * img_w
    valid = p < hw                                     # padded tail
    rmask = jnp.logical_and(valid, rowf >= float(zero_rows))
    maskf = rmask.astype(jnp.float32)

    # ---- projective grid: [x, y, 1] @ theta^T, exact homogeneous divide ----
    t00 = theta_ref[b, 0]; t01 = theta_ref[b, 1]; t02 = theta_ref[b, 2]
    t10 = theta_ref[b, 3]; t11 = theta_ref[b, 4]; t12 = theta_ref[b, 5]
    t20 = theta_ref[b, 6]; t21 = theta_ref[b, 7]; t22 = theta_ref[b, 8]
    den = colf * t20 + rowf * t21 + t22
    den = jnp.where(valid, den, 1.0)                   # keep the padded tail finite
    x = (colf * t00 + rowf * t01 + t02) / den          # grid x
    gy = (colf * t10 + rowf * t11 + t12) / den         # grid y
    u = (Y_SCALE - gy) * (1.0 / Y_SCALE)               # normalized y = (255 - gy)/255
    x = jnp.where(valid, x, 0.0)
    u = jnp.where(valid, u, 0.0)

    # u powers hoisted once across classes
    u2 = u * u
    u3 = u2 * u
    u4 = u2 * u2
    xu = x * u
    xu2 = x * u2

    def rsum(a):                                       # sublane reduce -> (1, LANE)
        return jnp.sum(a, axis=0, keepdims=True)

    for c in range(ncls):
        w = w_ref[0, c]                                # (s_tile, LANE) raw output
        m = (w * w) * maskf                            # square activation + index_fill
        masked_ref[0, c] = m
        ws = m * m                                     # LS weight Wc^2 = output^4 * mask
        wsx = ws * x
        tile_mom = jnp.concatenate(
            [rsum(ws), rsum(ws * u), rsum(ws * u2), rsum(ws * u3), rsum(ws * u4),
             rsum(wsx), rsum(ws * xu), rsum(ws * xu2)], axis=0)   # (8, LANE)

        @pl.when(t == 0)
        def _init(c=c, tile_mom=tile_mom):
            mom_ref[0, c] = tile_mom

        @pl.when(t > 0)
        def _acc(c=c, tile_mom=tile_mom):
            mom_ref[0, c] += tile_mom


def wls_pallas(w4d, theta_flat, *, img_w, hw, zero_rows, s_tile):
    """w4d: (bs, ncls, S_pad, 128) raw network output, lane-dense flattened HW.
       theta_flat: (bs, 9) homography, scalar-prefetched to SMEM.
       Returns masked (bs,ncls,S_pad,128) and lane-partial moments (bs,ncls,8,128)."""
    bs, ncls, s_pad, lane = w4d.shape
    assert lane == LANE and s_pad % s_tile == 0
    n_tiles = s_pad // s_tile
    kernel = functools.partial(_wls_kernel, ncls=ncls, s_tile=s_tile,
                               img_w=img_w, hw=hw, zero_rows=zero_rows)
    return pl.pallas_call(
        kernel,
        out_shape=(
            jax.ShapeDtypeStruct((bs, ncls, s_pad, LANE), jnp.float32),
            jax.ShapeDtypeStruct((bs, ncls, 8, LANE), jnp.float32),
        ),
        grid_spec=pltpu.PrefetchScalarGridSpec(
            num_scalar_prefetch=1,                     # theta (bs, 9) -> SMEM
            grid=(bs, n_tiles),
            in_specs=[
                pl.BlockSpec((1, ncls, s_tile, LANE),
                             lambda b, t, theta: (b, 0, t, 0)),
            ],
            out_specs=[
                pl.BlockSpec((1, ncls, s_tile, LANE),
                             lambda b, t, theta: (b, 0, t, 0)),
                # constant block index along t -> resident moment accumulator
                pl.BlockSpec((1, ncls, 8, LANE),
                             lambda b, t, theta: (b, 0, 0, 0)),
            ],
        ),
        compiler_params=pltpu.CompilerParams(
            dimension_semantics=("parallel", "arbitrary")),
    )(theta_flat, w4d)


# ---------------------------------------------------------------------------
# Net.forward (end_to_end=True, clas=False, order=2)
# ---------------------------------------------------------------------------
def net_forward(output, theta, *, nclasses, order, reg_ls, zero_rows,
                return_moments=False):
    # TODO(synk): the self.net backbone (Networks.define_model), get_homography, the
    # classification branch and the not-end_to_end / gt_line branch are external or
    # disabled in this configuration; `output` stands in for the backbone output.
    assert order == 2, "only the configured order=2 polynomial fit is implemented"
    bs, ncls, H, Wim = output.shape
    assert ncls == nclasses
    HW = H * Wim
    output = output.astype(jnp.float32)

    # lane-dense tiling of the flattened HW axis; sublanes padded to a multiple of 8
    s_needed = pl.cdiv(HW, LANE)
    s_tile = min(_round_up(s_needed, SUBLANE), 512)    # <= ~0.5 MiB / class / buffer
    s_pad = _round_up(s_needed, s_tile)
    assert s_pad * LANE < 2 ** 23                      # exact f32 index arithmetic
    padn = s_pad * LANE - HW

    w_flat = output.reshape(bs, ncls, HW)
    if padn:
        w_flat = jnp.pad(w_flat, ((0, 0), (0, 0), (0, padn)))
    w4d = w_flat.reshape(bs, ncls, s_pad, LANE)
    theta_flat = theta.astype(jnp.float32).reshape(bs, 9)

    masked4, mom = wls_pallas(w4d, theta_flat, img_w=Wim, hw=HW,
                              zero_rows=zero_rows, s_tile=s_tile)

    masked = masked4.reshape(bs, ncls, s_pad * LANE)[:, :, :HW]
    masked = masked.reshape(bs, ncls, H, Wim)

    # ---- host float64 finalize: 128-lane reduction + tiny 3x3 normal-eq solve ----
    # (mirrors torch's beta.double(); TPU has no native f64 and the solve is O(1) work)
    moments = np.asarray(jax.device_get(mom), np.float64).sum(axis=-1)   # (bs,ncls,8)
    m0, m1, m2, m3, m4 = (moments[..., k] for k in range(5))
    r0, r1, r2 = (moments[..., 5 + k] for k in range(3))

    # Normal equations in the normalized frame u = y / s (s = 255), Y = [y^2, y, 1]:
    #   beta = D^-1 (Zn + reg * D^-2)^-1 rn,  with D = diag(s^2, s, 1)
    # which is algebraically identical to (Y^T W^2 Y + reg*I)^-1 (Y^T W^2 x).
    d = np.array([Y_SCALE ** -2, Y_SCALE ** -1, 1.0], np.float64)
    Zn = np.stack([np.stack([m4, m3, m2], axis=-1),
                   np.stack([m3, m2, m1], axis=-1),
                   np.stack([m2, m1, m0], axis=-1)], axis=-2)            # (bs,ncls,3,3)
    rn = np.stack([r2, r1, r0], axis=-1)[..., None]                      # (bs,ncls,3,1)
    A = Zn + float(reg_ls) * np.diag(d * d)
    betas = np.linalg.solve(A, rn) * d[:, None]                          # (bs,ncls,3,1)

    beta0 = betas[:, 0]
    beta1 = betas[:, 1]
    beta2 = betas[:, 2] if nclasses > 3 else None
    beta3 = betas[:, 3] if nclasses > 3 else None

    line, horizon, output_seg = None, None, None                         # clas=False
    result = (beta0, beta1, beta2, beta3, masked, output,
              line, horizon, output_seg)
    if return_moments:
        return result, moments
    return result


# ---------------------------------------------------------------------------
if __name__ == "__main__":
    batch_size, nclasses, resize = 2, 2, 16
    order, reg_ls, mask_percentage = 2, 1.0, 0.3
    H, Wim = resize, 2 * resize
    zero_rows = math.ceil(resize * mask_percentage)

    # deterministic stand-in homography (get_homography is external); chosen so the
    # back-projected y spans most of [0, 255] like a real BEV mapping.
    M = jnp.array([[1.0, -0.3, 8.0],
                   [0.0, 16.5, 2.0],
                   [0.0, -0.001, 1.0]], jnp.float32)
    theta = jnp.broadcast_to(M[None], (batch_size, 3, 3))

    key = jax.random.PRNGKey(0)
    output = jax.random.normal(key, (batch_size, nclasses, H, Wim), jnp.float32)

    (beta0, beta1, beta2, beta3, masked, out, line, horizon, output_seg), moments = \
        net_forward(output, theta, nclasses=nclasses, order=order,
                    reg_ls=reg_ls, zero_rows=zero_rows, return_moments=True)
    jax.block_until_ready((masked, out))

    # ------------------- float64 numpy reference (the torch math) -------------------
    HW = H * Wim
    cols = np.tile(np.arange(Wim, dtype=np.float64)[None, :], (H, 1)).reshape(-1)
    rows = np.tile(np.arange(H, dtype=np.float64)[:, None], (1, Wim)).reshape(-1)
    base = np.stack([cols, rows, np.ones_like(cols)], axis=-1)           # (HW, 3)
    theta64 = np.asarray(theta, np.float64)
    g = np.einsum('pk,bjk->bpj', base, theta64)                          # (bs, HW, 3)
    x_np = g[:, :, 0] / g[:, :, 2]
    y_np = 255.0 - g[:, :, 1] / g[:, :, 2]
    u_np = y_np / Y_SCALE

    rmask = (rows >= zero_rows).astype(np.float64)
    out_np = np.asarray(output, np.float64).reshape(batch_size, nclasses, HW)
    W_np = (out_np ** 2) * rmask                                         # masked activation
    ws_np = W_np ** 2                                                    # LS weight

    # 1) masked map (square activation + index_fill of the top rows)
    np.testing.assert_allclose(
        np.asarray(masked, np.float64).reshape(batch_size, nclasses, HW),
        W_np, rtol=1e-5, atol=1e-5)

    # 2) weighted y-moments produced by the kernel (tight: validates the kernel math)
    mom_ref = np.stack(
        [np.einsum('bcp,bp->bc', ws_np, u_np ** k) for k in range(5)] +
        [np.einsum('bcp,bp->bc', ws_np, x_np * u_np ** j) for j in range(3)],
        axis=-1)                                                         # (bs, ncls, 8)
    np.testing.assert_allclose(moments, mom_ref, rtol=1e-4, atol=1e-6)

    # 3) betas vs the float64 least-squares reference.  The device pipeline evaluates
    #    the polynomial basis / moment products in float32, so through the conditioning
    #    of the order-2 normal equations agreement is at the ~1% level.
    Y_np = np.stack([y_np ** 2, y_np, np.ones_like(y_np)], axis=2)       # (bs, HW, 3)
    betas_ref = []
    for c in range(nclasses):
        Yc = W_np[:, c, :, None] * Y_np
        Z = np.einsum('bpi,bpj->bij', Yc, Yc) + reg_ls * np.eye(3)
        rhs = np.einsum('bpi,bp->bi', Yc, W_np[:, c] * x_np)[..., None]
        betas_ref.append(np.linalg.solve(Z, rhs))
    np.testing.assert_allclose(beta0, betas_ref[0], rtol=1e-1, atol=1e-2)
    np.testing.assert_allclose(beta1, betas_ref[1], rtol=1e-1, atol=1e-2)

    print("KERNEL_OK")
</pallas_src>

<mosaic_0001>
module attributes {stable_mosaic.version = 11 : i64} {
  func.func @_wls_kernel(%arg0: i32, %arg1: i32, %arg2: memref<2x9xf32, #tpu.memory_space<smem>>, %arg3: memref<1x2x8x128xf32, #tpu.memory_space<vmem>>, %arg4: memref<1x2x8x128xf32, #tpu.memory_space<vmem>>, %arg5: memref<1x2x8x128xf32, #tpu.memory_space<vmem>>) attributes {dimension_semantics = [#tpu.dimension_semantics<parallel>, #tpu.dimension_semantics<arbitrary>], iteration_bounds = array<i64: 2, 1>, scalar_prefetch = 1 : i64, scratch_operands = 0 : i64, tpu.core_type = #tpu.core_type<tc>, window_params = [{transform_indices = @transform_0, window_bounds = array<i64: 1, 2, 8, 128>}, {transform_indices = @transform_1, window_bounds = array<i64: 1, 2, 8, 128>}, {transform_indices = @transform_2, window_bounds = array<i64: 1, 2, 8, 128>}]} {
    %0 = tpu.iota {dimensions = array<i32: 0>} : vector<8x128xi32>
    %1 = tpu.iota {dimensions = array<i32: 1>} : vector<8x128xi32>
    %c8_i32 = arith.constant 8 : i32
    %2 = arith.muli %arg1, %c8_i32 : i32
    %3 = vector.broadcast %2 : i32 to vector<8x128xi32>
    %4 = arith.addi %3, %0 : vector<8x128xi32>
    %c128_i32 = arith.constant 128 : i32
    %5 = vector.broadcast %c128_i32 : i32 to vector<8x128xi32>
    %6 = arith.muli %4, %5 : vector<8x128xi32>
    %7 = arith.addi %6, %1 : vector<8x128xi32>
    %8 = arith.sitofp %7 : vector<8x128xi32> to vector<8x128xf32>
    %cst = arith.constant 5.000000e-01 : f32
    %9 = vector.broadcast %cst : f32 to vector<8x128xf32>
    %10 = arith.addf %8, %9 : vector<8x128xf32>
    %cst_0 = arith.constant 3.125000e-02 : f32
    %11 = vector.broadcast %cst_0 : f32 to vector<8x128xf32>
    %12 = arith.mulf %10, %11 : vector<8x128xf32>
    %13 = math.floor %12 : vector<8x128xf32>
    %cst_1 = arith.constant 3.200000e+01 : f32
    %14 = vector.broadcast %cst_1 : f32 to vector<8x128xf32>
    %15 = arith.mulf %13, %14 : vector<8x128xf32>
    %16 = arith.subf %8, %15 : vector<8x128xf32>
    %c512_i32 = arith.constant 512 : i32
    %17 = vector.broadcast %c512_i32 : i32 to vector<8x128xi32>
    %18 = arith.cmpi slt, %7, %17 : vector<8x128xi32>
    %cst_2 = arith.constant 5.000000e+00 : f32
    %19 = vector.broadcast %cst_2 : f32 to vector<8x128xf32>
    %20 = arith.cmpf oge, %13, %19 : vector<8x128xf32>
    %21 = arith.andi %18, %20 : vector<8x128xi1>
    %22 = arith.extui %21 : vector<8x128xi1> to vector<8x128xi32>
    %23 = arith.sitofp %22 : vector<8x128xi32> to vector<8x128xf32>
    %24 = arith.index_cast %arg0 : i32 to index
    %c0 = arith.constant 0 : index
    %25 = memref.load %arg2[%24, %c0] : memref<2x9xf32, #tpu.memory_space<smem>>
    %26 = arith.index_cast %arg0 : i32 to index
    %c1 = arith.constant 1 : index
    %27 = memref.load %arg2[%26, %c1] : memref<2x9xf32, #tpu.memory_space<smem>>
    %28 = arith.index_cast %arg0 : i32 to index
    %c2 = arith.constant 2 : index
    %29 = memref.load %arg2[%28, %c2] : memref<2x9xf32, #tpu.memory_space<smem>>
    %30 = arith.index_cast %arg0 : i32 to index
    %c3 = arith.constant 3 : index
    %31 = memref.load %arg2[%30, %c3] : memref<2x9xf32, #tpu.memory_space<smem>>
    %32 = arith.index_cast %arg0 : i32 to index
    %c4 = arith.constant 4 : index
    %33 = memref.load %arg2[%32, %c4] : memref<2x9xf32, #tpu.memory_space<smem>>
    %34 = arith.index_cast %arg0 : i32 to index
    %c5 = arith.constant 5 : index
    %35 = memref.load %arg2[%34, %c5] : memref<2x9xf32, #tpu.memory_space<smem>>
    %36 = arith.index_cast %arg0 : i32 to index
    %c6 = arith.constant 6 : index
    %37 = memref.load %arg2[%36, %c6] : memref<2x9xf32, #tpu.memory_space<smem>>
    %38 = arith.index_cast %arg0 : i32 to index
    %c7 = arith.constant 7 : index
    %39 = memref.load %arg2[%38, %c7] : memref<2x9xf32, #tpu.memory_space<smem>>
    %40 = arith.index_cast %arg0 : i32 to index
    %c8 = arith.constant 8 : index
    %41 = memref.load %arg2[%40, %c8] : memref<2x9xf32, #tpu.memory_space<smem>>
    %42 = vector.broadcast %37 : f32 to vector<8x128xf32>
    %43 = arith.mulf %16, %42 : vector<8x128xf32>
    %44 = vector.broadcast %39 : f32 to vector<8x128xf32>
    %45 = arith.mulf %13, %44 : vector<8x128xf32>
    %46 = arith.addf %43, %45 : vector<8x128xf32>
    %47 = vector.broadcast %41 : f32 to vector<8x128xf32>
    %48 = arith.addf %46, %47 : vector<8x128xf32>
    %cst_3 = arith.constant 1.000000e+00 : f32
    %49 = vector.broadcast %cst_3 : f32 to vector<8x128xf32>
    %50 = arith.select %18, %48, %49 : vector<8x128xi1>, vector<8x128xf32>
    %51 = vector.broadcast %25 : f32 to vector<8x128xf32>
    %52 = arith.mulf %16, %51 : vector<8x128xf32>
    %53 = vector.broadcast %27 : f32 to vector<8x128xf32>
    %54 = arith.mulf %13, %53 : vector<8x128xf32>
    %55 = arith.addf %52, %54 : vector<8x128xf32>
    %56 = vector.broadcast %29 : f32 to vector<8x128xf32>
    %57 = arith.addf %55, %56 : vector<8x128xf32>
    %58 = arith.divf %57, %50 : vector<8x128xf32>
    %59 = vector.broadcast %31 : f32 to vector<8x128xf32>
    %60 = arith.mulf %16, %59 : vector<8x128xf32>
    %61 = vector.broadcast %33 : f32 to vector<8x128xf32>
    %62 = arith.mulf %13, %61 : vector<8x128xf32>
    %63 = arith.addf %60, %62 : vector<8x128xf32>
    %64 = vector.broadcast %35 : f32 to vector<8x128xf32>
    %65 = arith.addf %63, %64 : vector<8x128xf32>
    %66 = arith.divf %65, %50 : vector<8x128xf32>
    %cst_4 = arith.constant 2.550000e+02 : f32
    %67 = vector.broadcast %cst_4 : f32 to vector<8x128xf32>
    %68 = arith.subf %67, %66 : vector<8x128xf32>
    %cst_5 = arith.constant 0.00392156886 : f32
    %69 = vector.broadcast %cst_5 : f32 to vector<8x128xf32>
    %70 = arith.mulf %68, %69 : vector<8x128xf32>
    %cst_6 = arith.constant 0.000000e+00 : f32
    %71 = vector.broadcast %cst_6 : f32 to vector<8x128xf32>
    %72 = arith.select %18, %58, %71 : vector<8x128xi1>, vector<8x128xf32>
    %cst_7 = arith.constant 0.000000e+00 : f32
    %73 = vector.broadcast %cst_7 : f32 to vector<8x128xf32>
    %74 = arith.select %18, %70, %73 : vector<8x128xi1>, vector<8x128xf32>
    %75 = arith.mulf %74, %74 : vector<8x128xf32>
    %76 = arith.mulf %75, %74 : vector<8x128xf32>
    %77 = arith.mulf %75, %75 : vector<8x128xf32>
    %78 = arith.mulf %72, %74 : vector<8x128xf32>
    %79 = arith.mulf %72, %75 : vector<8x128xf32>
    %c0_8 = arith.constant 0 : index
    %c0_9 = arith.constant 0 : index
    %c0_10 = arith.constant 0 : index
    %c0_11 = arith.constant 0 : index
    %80 = vector.load %arg3[%c0_8, %c0_9, %c0_10, %c0_11] : memref<1x2x8x128xf32, #tpu.memory_space<vmem>>, vector<1x1x8x128xf32>
    %81 = vector.shape_cast %80 : vector<1x1x8x128xf32> to vector<8x128xf32>
    %82 = arith.mulf %81, %81 : vector<8x128xf32>
    %83 = arith.mulf %82, %23 : vector<8x128xf32>
    %c0_12 = arith.constant 0 : index
    %c0_13 = arith.constant 0 : index
    %c0_14 = arith.constant 0 : index
    %c0_15 = arith.constant 0 : index
    %84 = vector.load %arg4[%c0_12, %c0_13, %c0_14, %c0_15] : memref<1x2x8x128xf32, #tpu.memory_space<vmem>>, vector<1x1x8x128xf32>
    %85 = vector.shape_cast %84 : vector<1x1x8x128xf32> to vector<8x128xf32>
    %86 = vector.shape_cast %83 : vector<8x128xf32> to vector<1x1x8x128xf32>
    tpu.vector_store %arg4[%c0_12, %c0_13, %c0_14, %c0_15], %86 {strides = array<i32>} : memref<1x2x8x128xf32, #tpu.memory_space<vmem>>, vector<1x1x8x128xf32>,
    %87 = arith.mulf %83, %83 : vector<8x128xf32>
    %88 = arith.mulf %87, %72 : vector<8x128xf32>
    %cst_16 = arith.constant dense<0.000000e+00> : vector<128xf32>
    %89 = vector.multi_reduction <add>, %87, %cst_16 [0] : vector<8x128xf32> to vector<128xf32>
    %90 = vector.shape_cast %89 : vector<128xf32> to vector<1x128xf32>
    %91 = arith.mulf %87, %74 : vector<8x128xf32>
    %cst_17 = arith.constant dense<0.000000e+00> : vector<128xf32>
    %92 = vector.multi_reduction <add>, %91, %cst_17 [0] : vector<8x128xf32> to vector<128xf32>
    %93 = vector.shape_cast %92 : vector<128xf32> to vector<1x128xf32>
    %94 = arith.mulf %87, %75 : vector<8x128xf32>
    %cst_18 = arith.constant dense<0.000000e+00> : vector<128xf32>
    %95 = vector.multi_reduction <add>, %94, %cst_18 [0] : vector<8x128xf32> to vector<128xf32>
    %96 = vector.shape_cast %95 : vector<128xf32> to vector<1x128xf32>
    %97 = arith.mulf %87, %76 : vector<8x128xf32>
    %cst_19 = arith.constant dense<0.000000e+00> : vector<128xf32>
    %98 = vector.multi_reduction <add>, %97, %cst_19 [0] : vector<8x128xf32> to vector<128xf32>
    %99 = vector.shape_cast %98 : vector<128xf32> to vector<1x128xf32>
    %100 = arith.mulf %87, %77 : vector<8x128xf32>
    %cst_20 = arith.constant dense<0.000000e+00> : vector<128xf32>
    %101 = vector.multi_reduction <add>, %100, %cst_20 [0] : vector<8x128xf32> to vector<128xf32>
    %102 = vector.shape_cast %101 : vector<128xf32> to vector<1x128xf32>
    %cst_21 = arith.constant dense<0.000000e+00> : vector<128xf32>
    %103 = vector.multi_reduction <add>, %88, %cst_21 [0] : vector<8x128xf32> to vector<128xf32>
    %104 = vector.shape_cast %103 : vector<128xf32> to vector<1x128xf32>
    %105 = arith.mulf %87, %78 : vector<8x128xf32>
    %cst_22 = arith.constant dense<0.000000e+00> : vector<128xf32>
    %106 = vector.multi_reduction <add>, %105, %cst_22 [0] : vector<8x128xf32> to vector<128xf32>
    %107 = vector.shape_cast %106 : vector<128xf32> to vector<1x128xf32>
    %108 = arith.mulf %87, %79 : vector<8x128xf32>
    %cst_23 = arith.constant dense<0.000000e+00> : vector<128xf32>
    %109 = vector.multi_reduction <add>, %108, %cst_23 [0] : vector<8x128xf32> to vector<128xf32>
    %110 = vector.shape_cast %109 : vector<128xf32> to vector<1x128xf32>
    %111 = tpu.concatenate %90, %93, %96, %99, %102, %104, %107, %110 in 0 : vector<1x128xf32>, vector<1x128xf32>, vector<1x128xf32>, vector<1x128xf32>, vector<1x128xf32>, vector<1x128xf32>, vector<1x128xf32>, vector<1x128xf32> -> vector<8x128xf32>
    %c0_i32 = arith.constant 0 : i32
    %112 = arith.cmpi eq, %arg1, %c0_i32 : i32
    %113 = arith.extui %112 : i1 to i32
    %c0_i32_24 = arith.constant 0 : i32
    %114 = arith.cmpi ne, %113, %c0_i32_24 : i32
    scf.if %114 {
      %c0_47 = arith.constant 0 : index
      %c0_48 = arith.constant 0 : index
      %c0_49 = arith.constant 0 : index
      %c0_50 = arith.constant 0 : index
      %156 = vector.load %arg5[%c0_47, %c0_48, %c0_49, %c0_50] : memref<1x2x8x128xf32, #tpu.memory_space<vmem>>, vector<1x1x8x128xf32>
      %157 = vector.shape_cast %156 : vector<1x1x8x128xf32> to vector<8x128xf32>
      %158 = vector.shape_cast %111 : vector<8x128xf32> to vector<1x1x8x128xf32>
      tpu.vector_store %arg5[%c0_47, %c0_48, %c0_49, %c0_50], %158 {strides = array<i32>} : memref<1x2x8x128xf32, #tpu.memory_space<vmem>>, vector<1x1x8x128xf32>,
    } else {
    }
    %c0_i32_25 = arith.constant 0 : i32
    %115 = arith.cmpi sgt, %arg1, %c0_i32_25 : i32
    %116 = arith.extui %115 : i1 to i32
    %c0_i32_26 = arith.constant 0 : i32
    %117 = arith.cmpi ne, %116, %c0_i32_26 : i32
    scf.if %117 {
      %c0_47 = arith.constant 0 : index
      %c0_48 = arith.constant 0 : index
      %c0_49 = arith.constant 0 : index
      %c0_50 = arith.constant 0 : index
      %156 = vector.load %arg5[%c0_47, %c0_48, %c0_49, %c0_50] : memref<1x2x8x128xf32, #tpu.memory_space<vmem>>, vector<1x1x8x128xf32>
      %157 = vector.shape_cast %156 : vector<1x1x8x128xf32> to vector<8x128xf32>
      %158 = arith.addf %157, %111 : vector<8x128xf32>
      %c0_51 = arith.constant 0 : index
      %c0_52 = arith.constant 0 : index
      %c0_53 = arith.constant 0 : index
      %c0_54 = arith.constant 0 : index
      %159 = vector.load %arg5[%c0_51, %c0_52, %c0_53, %c0_54] : memref<1x2x8x128xf32, #tpu.memory_space<vmem>>, vector<1x1x8x128xf32>
      %160 = vector.shape_cast %159 : vector<1x1x8x128xf32> to vector<8x128xf32>
      %161 = vector.shape_cast %158 : vector<8x128xf32> to vector<1x1x8x128xf32>
      tpu.vector_store %arg5[%c0_51, %c0_52, %c0_53, %c0_54], %161 {strides = array<i32>} : memref<1x2x8x128xf32, #tpu.memory_space<vmem>>, vector<1x1x8x128xf32>,
    } else {
    }
    %c0_27 = arith.constant 0 : index
    %c1_28 = arith.constant 1 : index
    %c0_29 = arith.constant 0 : index
    %c0_30 = arith.constant 0 : index
    %118 = vector.load %arg3[%c0_27, %c1_28, %c0_29, %c0_30] : memref<1x2x8x128xf32, #tpu.memory_space<vmem>>, vector<1x1x8x128xf32>
    %119 = vector.shape_cast %118 : vector<1x1x8x128xf32> to vector<8x128xf32>
    %120 = arith.mulf %119, %119 : vector<8x128xf32>
    %121 = arith.mulf %120, %23 : vector<8x128xf32>
    %c0_31 = arith.constant 0 : index
    %c1_32 = arith.constant 1 : index
    %c0_33 = arith.constant 0 : index
    %c0_34 = arith.constant 0 : index
    %122 = vector.load %arg4[%c0_31, %c1_32, %c0_33, %c0_34] : memref<1x2x8x128xf32, #tpu.memory_space<vmem>>, vector<1x1x8x128xf32>
    %123 = vector.shape_cast %122 : vector<1x1x8x128xf32> to vector<8x128xf32>
    %124 = vector.shape_cast %121 : vector<8x128xf32> to vector<1x1x8x128xf32>
    tpu.vector_store %arg4[%c0_31, %c1_32, %c0_33, %c0_34], %124 {strides = array<i32>} : memref<1x2x8x128xf32, #tpu.memory_space<vmem>>, vector<1x1x8x128xf32>,
    %125 = arith.mulf %121, %121 : vector<8x128xf32>
    %126 = arith.mulf %125, %72 : vector<8x128xf32>
    %cst_35 = arith.constant dense<0.000000e+00> : vector<128xf32>
    %127 = vector.multi_reduction <add>, %125, %cst_35 [0] : vector<8x128xf32> to vector<128xf32>
    %128 = vector.shape_cast %127 : vector<128xf32> to vector<1x128xf32>
    %129 = arith.mulf %125, %74 : vector<8x128xf32>
    %cst_36 = arith.constant dense<0.000000e+00> : vector<128xf32>
    %130 = vector.multi_reduction <add>, %129, %cst_36 [0] : vector<8x128xf32> to vector<128xf32>
    %131 = vector.shape_cast %130 : vector<128xf32> to vector<1x128xf32>
    %132 = arith.mulf %125, %75 : vector<8x128xf32>
    %cst_37 = arith.constant dense<0.000000e+00> : vector<128xf32>
    %133 = vector.multi_reduction <add>, %132, %cst_37 [0] : vector<8x128xf32> to vector<128xf32>
    %134 = vector.shape_cast %133 : vector<128xf32> to vector<1x128xf32>
    %135 = arith.mulf %125, %76 : vector<8x128xf32>
    %cst_38 = arith.constant dense<0.000000e+00> : vector<128xf32>
    %136 = vector.multi_reduction <add>, %135, %cst_38 [0] : vector<8x128xf32> to vector<128xf32>
    %137 = vector.shape_cast %136 : vector<128xf32> to vector<1x128xf32>
    %138 = arith.mulf %125, %77 : vector<8x128xf32>
    %cst_39 = arith.constant dense<0.000000e+00> : vector<128xf32>
    %139 = vector.multi_reduction <add>, %138, %cst_39 [0] : vector<8x128xf32> to vector<128xf32>
    %140 = vector.shape_cast %139 : vector<128xf32> to vector<1x128xf32>
    %cst_40 = arith.constant dense<0.000000e+00> : vector<128xf32>
    %141 = vector.multi_reduction <add>, %126, %cst_40 [0] : vector<8x128xf32> to vector<128xf32>
    %142 = vector.shape_cast %141 : vector<128xf32> to vector<1x128xf32>
    %143 = arith.mulf %125, %78 : vector<8x128xf32>
    %cst_41 = arith.constant dense<0.000000e+00> : vector<128xf32>
    %144 = vector.multi_reduction <add>, %143, %cst_41 [0] : vector<8x128xf32> to vector<128xf32>
    %145 = vector.shape_cast %144 : vector<128xf32> to vector<1x128xf32>
    %146 = arith.mulf %125, %79 : vector<8x128xf32>
    %cst_42 = arith.constant dense<0.000000e+00> : vector<128xf32>
    %147 = vector.multi_reduction <add>, %146, %cst_42 [0] : vector<8x128xf32> to vector<128xf32>
    %148 = vector.shape_cast %147 : vector<128xf32> to vector<1x128xf32>
    %149 = tpu.concatenate %128, %131, %134, %137, %140, %142, %145, %148 in 0 : vector<1x128xf32>, vector<1x128xf32>, vector<1x128xf32>, vector<1x128xf32>, vector<1x128xf32>, vector<1x128xf32>, vector<1x128xf32>, vector<1x128xf32> -> vector<8x128xf32>
    %c0_i32_43 = arith.constant 0 : i32
    %150 = arith.cmpi eq, %arg1, %c0_i32_43 : i32
    %151 = arith.extui %150 : i1 to i32
    %c0_i32_44 = arith.constant 0 : i32
    %152 = arith.cmpi ne, %151, %c0_i32_44 : i32
    scf.if %152 {
      %c0_47 = arith.constant 0 : index
      %c1_48 = arith.constant 1 : index
      %c0_49 = arith.constant 0 : index
      %c0_50 = arith.constant 0 : index
      %156 = vector.load %arg5[%c0_47, %c1_48, %c0_49, %c0_50] : memref<1x2x8x128xf32, #tpu.memory_space<vmem>>, vector<1x1x8x128xf32>
      %157 = vector.shape_cast %156 : vector<1x1x8x128xf32> to vector<8x128xf32>
      %158 = vector.shape_cast %149 : vector<8x128xf32> to vector<1x1x8x128xf32>
      tpu.vector_store %arg5[%c0_47, %c1_48, %c0_49, %c0_50], %158 {strides = array<i32>} : memref<1x2x8x128xf32, #tpu.memory_space<vmem>>, vector<1x1x8x128xf32>,
    } else {
    }
    %c0_i32_45 = arith.constant 0 : i32
    %153 = arith.cmpi sgt, %arg1, %c0_i32_45 : i32
    %154 = arith.extui %153 : i1 to i32
    %c0_i32_46 = arith.constant 0 : i32
    %155 = arith.cmpi ne, %154, %c0_i32_46 : i32
    scf.if %155 {
      %c0_47 = arith.constant 0 : index
      %c1_48 = arith.constant 1 : index
      %c0_49 = arith.constant 0 : index
      %c0_50 = arith.constant 0 : index
      %156 = vector.load %arg5[%c0_47, %c1_48, %c0_49, %c0_50] : memref<1x2x8x128xf32, #tpu.memory_space<vmem>>, vector<1x1x8x128xf32>
      %157 = vector.shape_cast %156 : vector<1x1x8x128xf32> to vector<8x128xf32>
      %158 = arith.addf %157, %149 : vector<8x128xf32>
      %c0_51 = arith.constant 0 : index
      %c1_52 = arith.constant 1 : index
      %c0_53 = arith.constant 0 : index
      %c0_54 = arith.constant 0 : index
      %159 = vector.load %arg5[%c0_51, %c1_52, %c0_53, %c0_54] : memref<1x2x8x128xf32, #tpu.memory_space<vmem>>, vector<1x1x8x128xf32>
      %160 = vector.shape_cast %159 : vector<1x1x8x128xf32> to vector<8x128xf32>
      %161 = vector.shape_cast %158 : vector<8x128xf32> to vector<1x1x8x128xf32>
      tpu.vector_store %arg5[%c0_51, %c1_52, %c0_53, %c0_54], %161 {strides = array<i32>} : memref<1x2x8x128xf32, #tpu.memory_space<vmem>>, vector<1x1x8x128xf32>,
    } else {
    }
    return
  }
  func.func @transform_0(%arg0: i32, %arg1: i32, %arg2: memref<2x9xf32, #tpu.memory_space<smem>>) -> (i32, i32, i32, i32) {
    %c0_i32 = arith.constant 0 : i32
    %c0_i32_0 = arith.constant 0 : i32
    %c0_i32_1 = arith.constant 0 : i32
    return %arg0, %c0_i32, %arg1, %c0_i32_0 : i32, i32, i32, i32
  }
  func.func @transform_1(%arg0: i32, %arg1: i32, %arg2: memref<2x9xf32, #tpu.memory_space<smem>>) -> (i32, i32, i32, i32) {
    %c0_i32 = arith.constant 0 : i32
    %c0_i32_0 = arith.constant 0 : i32
    %c0_i32_1 = arith.constant 0 : i32
    return %arg0, %c0_i32, %arg1, %c0_i32_0 : i32, i32, i32, i32
  }
  func.func @transform_2(%arg0: i32, %arg1: i32, %arg2: memref<2x9xf32, #tpu.memory_space<smem>>) -> (i32, i32, i32, i32) {
    %c0_i32 = arith.constant 0 : i32
    %c0_i32_0 = arith.constant 0 : i32
    %c0_i32_1 = arith.constant 0 : i32
    %c0_i32_2 = arith.constant 0 : i32
    return %arg0, %c0_i32, %c0_i32_0, %c0_i32_1 : i32, i32, i32, i32
  }
}

</mosaic_0001>

<llo_original>
// kernel: tpu_custom_call.1
$region0: #{tpu_custom_call.1}
  #allocation0 [shape = 'u32[]', space=smem, size = 0x4, offset = 0x4, fixed_abs, tag = 'smem constant byte address 0x4 - core index']
  #allocation1 [shape = 'u32[144,128]{1,0:T(1,128)}', space=vmem, size = 0x12000, scoped, tag = 'internal scratch']
  #allocation2 [shape = 's32[1]{0}', space=sflag, size = 0x4, scoped, tag = 'scoped memory for tpu_custom_call.1']
  #allocation3 [shape = 'u8[1024]{0}', space=smem, size = 0x400, scoped, tag = 'prefetched SMEM operand 0']
  %s0 = inlined_call_operand.hbm [shape: f32[2,9], index: 0, kind: input, shape index: {}]
  %s1 = inlined_call_operand.hbm [shape: f32[2,2,8,128], index: 1, kind: input, shape index: {}]
  %s2 = inlined_call_operand.hbm [shape: f32[2,2,8,128], index: 2, kind: output, shape index: {0}]
  %s3 = inlined_call_operand.hbm [shape: f32[2,2,8,128], index: 3, kind: output, shape index: {1}]
  %4 = xla_tuple %s2, %s3
  %s5 = sld [smem:[#allocation0]]
  $region65: #{tpu_custom_call.1} parent=0
    _
  %s7 = ssub.s32 1, %s5
  %s8 = scalar_select 0, %s7, %s5
  %10 = dma.hbm_to_smem %s0, 32, [#allocation3], [#allocation2]
  %11 = dma.done [#allocation2], 32
  %12 = sfence
  $region1: #{tpu_custom_call.1} parent=0
    #allocation4 [shape = 'u8[16384]{0}', space=vmem, size = 0x4000, scoped, tag = 'input window, operand 1']
    #allocation5 [shape = 's32[2]{0}', space=sflag, size = 0x8, scoped, tag = 'scoped memory for tpu_custom_call.1']
    #allocation6 [shape = 's32[2]{0}', space=sflag, size = 0x8, scoped, tag = 'scoped memory for tpu_custom_call.1']
    #allocation7 [shape = 'u8[16384]{0}', space=vmem, size = 0x4000, scoped, tag = 'output window, operand 0']
    #allocation8 [shape = 'u8[16384]{0}', space=vmem, size = 0x4000, scoped, tag = 'output window, operand 1']
    #allocation9 [shape = 's32[2]{0}', space=sflag, size = 0x8, scoped, tag = 'scoped memory for tpu_custom_call.1']
    %13 = vsyncpa [#allocation5], 0
    %s14 = scalar_lea.sflag [#allocation5], 1
    %15 = vsyncpa %s14, 0
    %16 = vsyncpa [#allocation6], 0
    %s17 = scalar_lea.sflag [#allocation6], 1
    %18 = vsyncpa %s17, 0
    %19 = vsyncpa [#allocation9], 0
    %s20 = scalar_lea.sflag [#allocation9], 1
    %21 = vsyncpa %s20, 0
    loop: start=0, step=1, limit=4
    $region2: #{tpu_custom_call.1} parent=1 // loop_pre_header
      _
    $region3: #{tpu_custom_call.1} parent=1 // loop_header
      %s23 = sphi 0, %s27
      %p24 = scmp.ge.s32.totalorder %s23, 4
      %s30 = sphi 0, %s42
      %s31 = sphi 0, %s38
      %s32 = sphi 0, %s30
      %s33 = sphi 0, %s31
      %s34 = sphi 0, %s32
      %s35 = sphi 0, %s33
      %s47 = sphi 0, %s49
      %s50 = sphi 0, %s47
      %s51 = sphi 0, %s50
      %s67 = sphi 0, %s51
      %s75 = sphi 0, %s77
      %s78 = sphi 0, %s75
      %s79 = sphi 0, %s78
      %s95 = sphi 0, %s79
      %s101 = sphi 0, %s103
      %s104 = sphi 0, %s101
      %s105 = sphi 0, %s104
      %s121 = sphi 0, %s105
    $region4: #{tpu_custom_call.1} parent=1 // loop_header_branch
      %26 = sbr.rel (%p24) target = $region8
    $region5: #{tpu_custom_call.1} parent=1 // loop_body
      %s28 = ssub.s32 %s23, 1
      %s29 = ssub.s32 %s23, 2
      %s36 = sadd.s32 1, %s31
      %p37 = scmp.ge.s32.totalorder %s36, 1
      %s38 = scalar_select %p37, 0, %s36
      %s39 = sadd.s32 1, %s30
      %s40 = scalar_select %p37, %s39, %s30
      %p41 = scmp.ge.s32.totalorder %s40, 2
      %s42 = scalar_select %p41, 0, %s40
      %s43 = ssub.s32 %s30, %s42
      %s44 = ssub.s32 %s31, %s38
      %s45 = sor.u32 %s43, %s44
      %p46 = scmp.eq.s32.totalorder %s45, 0
      %s48 = sadd.s32 %s47, 1
      %s49 = scalar_select %p46, %s47, %s48
      %p52 = pneg %p46
      %p53 = scmp.eq.s32.totalorder %s23, 1
      %p54 = por %p52, %p53
      %p55 = scmp.ne.s32.totalorder %s47, %s50
      %p56 = scmp.eq.s32.totalorder %s23, 0
      %p57 = por %p55, %p56
      %p58 = scmp.ne.s32.totalorder %s47, %s50
      %p59 = scmp.eq.s32.totalorder %s28, 1
      %p60 = por %p58, %p59
      %p61 = scmp.ne.s32.totalorder %s50, %s51
      %p62 = scmp.eq.s32.totalorder %s28, 0
      %p63 = por %p61, %p62
      %p64 = scmp.ne.s32.totalorder %s50, %s51
      %p65 = scmp.eq.s32.totalorder %s29, 1
      %p66 = por %p64, %p65
      %p68 = scmp.ne.s32.totalorder %s51, %s67
      %p69 = scmp.eq.s32.totalorder %s29, 0
      %p70 = por %p68, %p69
      %s71 = ssub.s32 %s30, %s42
      %s72 = ssub.s32 %s31, %s38
      %s73 = sor.u32 %s71, %s72
      %p74 = scmp.eq.s32.totalorder %s73, 0
      %s76 = sadd.s32 %s75, 1
      %s77 = scalar_select %p74, %s75, %s76
      %p80 = pneg %p74
      %p81 = scmp.eq.s32.totalorder %s23, 1
      %p82 = por %p80, %p81
      %p83 = scmp.ne.s32.totalorder %s75, %s78
      %p84 = scmp.eq.s32.totalorder %s23, 0
      %p85 = por %p83, %p84
      %p86 = scmp.ne.s32.totalorder %s75, %s78
      %p87 = scmp.eq.s32.totalorder %s28, 1
      %p88 = por %p86, %p87
      %p89 = scmp.ne.s32.totalorder %s78, %s79
      %p90 = scmp.eq.s32.totalorder %s28, 0
      %p91 = por %p89, %p90
      %p92 = scmp.ne.s32.totalorder %s78, %s79
      %p93 = scmp.eq.s32.totalorder %s29, 1
      %p94 = por %p92, %p93
      %p96 = scmp.ne.s32.totalorder %s79, %s95
      %p97 = scmp.eq.s32.totalorder %s29, 0
      %p98 = por %p96, %p97
      %s99 = ssub.s32 %s30, %s42
      %p100 = scmp.eq.s32.totalorder %s99, 0
      %s102 = sadd.s32 %s101, 1
      %s103 = scalar_select %p100, %s101, %s102
      %p106 = pneg %p100
      %p107 = scmp.eq.s32.totalorder %s23, 1
      %p108 = por %p106, %p107
      %p109 = scmp.ne.s32.totalorder %s101, %s104
      %p110 = scmp.eq.s32.totalorder %s23, 0
      %p111 = por %p109, %p110
      %p112 = scmp.ne.s32.totalorder %s101, %s104
      %p113 = scmp.eq.s32.totalorder %s28, 1
      %p114 = por %p112, %p113
      %p115 = scmp.ne.s32.totalorder %s104, %s105
      %p116 = scmp.eq.s32.totalorder %s28, 0
      %p117 = por %p115, %p116
      %p118 = scmp.ne.s32.totalorder %s104, %s105
      %p119 = scmp.eq.s32.totalorder %s29, 1
      %p120 = por %p118, %p119
      %p122 = scmp.ne.s32.totalorder %s105, %s121
      %p123 = scmp.eq.s32.totalorder %s29, 0
      %p124 = por %p122, %p123
      %p125 = scmp.le.s32.totalorder 1, %s23
      %p126 = scmp.lt.s32.totalorder %s23, 3
      %p127 = pnand %p125, %p126
      %p128 = pneg %p127
      // Predicated region
      $region9: #{tpu_custom_call.1} parent=5 // pred_check
        _
      $region10: #{tpu_custom_call.1} parent=5 // pred_check_branch
        %130 = sbr.rel (%p127) target = $region12
      $region11: #{tpu_custom_call.1} parent=5 // pred_region
        %s131 = ssub.s32 %s23, 1
      $region12: #{tpu_custom_call.1} parent=5 // pred_fallthru
        _
      %p132 = scmp.lt.s32.totalorder %s23, 2
      // Predicated region
      $region13: #{tpu_custom_call.1} parent=5 // pred_check
        %p133 = pneg %p132
      $region14: #{tpu_custom_call.1} parent=5 // pred_check_branch
        %135 = sbr.rel (%p133) target = $region16
      $region15: #{tpu_custom_call.1} parent=5 // pred_region
        // Predicated region
        $region17: #{tpu_custom_call.1} parent=15 // pred_check
          %p136 = pneg %p57
        $region18: #{tpu_custom_call.1} parent=15 // pred_check_branch
          %138 = sbr.rel (%p136) target = $region20
        $region19: #{tpu_custom_call.1} parent=15 // pred_region
          %s139 = sand.u32 %s47, 1
          %s140 = scalar_lea.sflag [#allocation5], %s139
          %s141 = sand.u32 %s47, 1
          %s142 = smul.addr %s141, 16
          %s143 = scalar_lea.vmem [#allocation4], %s142
          %s145 = ssub.s32 256, 256
          %146 = vsyncadd %s140, %s145
          %s147 = smul.addr %s30, 2
          %s148 = sadd.s32 %s31, %s147
          %s149 = smul.addr %s148, 128
          %s150 = scalar_lea.hbm %s1, %s149
          %s151 = sshll.u32 %s143, 4
          %s152 = int_to_ptr.vmem [resolvable:$true] %s151
          %157 = dma.hbm_to_vmem [thread:$0]  %s150, 256, %s152, %s140, 128, 128, 8
        $region20: #{tpu_custom_call.1} parent=15 // pred_fallthru
          _
      $region16: #{tpu_custom_call.1} parent=5 // pred_fallthru
        _
      %p158 = scmp.le.s32.totalorder 1, %s23
      %p159 = scmp.lt.s32.totalorder %s23, 3
      %p160 = pnand %p158, %p159
      %p161 = pneg %p160
      // Predicated region
      $region21: #{tpu_custom_call.1} parent=5 // pred_check
        _
      $region22: #{tpu_custom_call.1} parent=5 // pred_check_branch
        %163 = sbr.rel (%p160) target = $region24
      $region23: #{tpu_custom_call.1} parent=5 // pred_region
        %s164 = ssub.s32 %s23, 1
        %s165 = sand.u32 %s50, 1
        %s166 = scalar_lea.sflag [#allocation5], %s165
        %s167 = sand.u32 %s50, 1
        %s168 = smul.addr %s167, 16
        %s169 = scalar_lea.vmem [#allocation4], %s168
        // Predicated region
        $region25: #{tpu_custom_call.1} parent=23 // pred_check
          %p170 = pneg %p63
        $region26: #{tpu_custom_call.1} parent=23 // pred_check_branch
          %172 = sbr.rel (%p170) target = $region28
        $region27: #{tpu_custom_call.1} parent=23 // pred_region
          %173 = dma.done %s166, 256
        $region28: #{tpu_custom_call.1} parent=23 // pred_fallthru
          _
        %s174 = sand.u32 %s50, 1
        %s175 = scalar_lea.sflag [#allocation5], %s174
        %s176 = sand.u32 %s50, 1
        %s177 = smul.addr %s176, 16
        %s178 = scalar_lea.vmem [#allocation4], %s177
        %p179 = pneg %p63
        %p180 = pneg %p60
        %p181 = pneg %p91
        %p182 = pneg %p88
        %s183 = sand.u32 %s78, 1
        %s184 = scalar_lea.sflag [#allocation6], %s183
        %s185 = sand.u32 %s78, 1
        %s186 = smul.addr %s185, 16
        %s187 = scalar_lea.vmem [#allocation7], %s186
        %p188 = pneg %p117
        %p189 = pneg %p114
        %s190 = sand.u32 %s104, 1
        %s191 = scalar_lea.sflag [#allocation9], %s190
        %s192 = sand.u32 %s104, 1
        %s193 = smul.addr %s192, 16
        %s194 = scalar_lea.vmem [#allocation8], %s193
        %v195 = vlaneseq
        %v196 = vshrl.u32 %v195, 7
        %v197 = vlaneseq
        %v198 = vand.u32 %v197, 127
        %s199 = smul.u32 %s33, 8
        %v200 = vstv %s199
        %v201 = vadd.s32 %v200, %v196
        %v202 = vmul.u32 %v201, 128
        %v203 = vadd.s32 %v202, %v198
        %v204 = vcvt.s32.f32 %v203
        %v205 = vadd.f32 %v204, 0.5
        %v206 = vmul.f32 %v205, 0.03125
        %v207 = vfloor.f32 %v206
        %v208 = vmul.f32 %v207, 32.0
        %v209 = vsub.f32 %v204, %v208
        %vm210 = vcmp.lt.s32.totalorder %v203, 512
        %vm211 = vcmp.ge.f32.partialorder %v207, 5.0
        %vm212 = vmand %vm210, %vm211
        %v213 = vsel %vm212, 1, 0
        %v214 = vcvt.s32.f32 %v213
        %s215 = smul.u32 %s32, 128
        %s216 = sld [smem:[#allocation3 + %s215]]
        %s217 = sadd.s32 %s215, 1
        %s218 = sld [smem:[#allocation3 + %s217]]
        %s219 = sadd.s32 %s215, 2
        %s220 = sld [smem:[#allocation3 + %s219]]
        %s221 = sadd.s32 %s215, 3
        %s222 = sld [smem:[#allocation3 + %s221]]
        %s223 = sadd.s32 %s215, 4
        %s224 = sld [smem:[#allocation3 + %s223]]
        %s225 = sadd.s32 %s215, 5
        %s226 = sld [smem:[#allocation3 + %s225]]
        %s227 = sadd.s32 %s215, 6
        %s228 = sld [smem:[#allocation3 + %s227]]
        %s229 = sadd.s32 %s215, 7
        %s230 = sld [smem:[#allocation3 + %s229]]
        %s231 = sadd.s32 %s215, 8
        %s232 = sld [smem:[#allocation3 + %s231]]
        %v233 = vstv %s228
        %v234 = vmul.f32 %v209, %v233
        %v235 = vstv %s230
        %v236 = vmul.f32 %v207, %v235
        %v237 = vadd.f32 %v234, %v236
        %v238 = vstv %s232
        %v239 = vadd.f32 %v237, %v238
        %v240 = vsel %vm210, %v239, 1.0
        %v241 = vstv %s216
        %v242 = vmul.f32 %v209, %v241
        %v243 = vstv %s218
        %v244 = vmul.f32 %v207, %v243
        %v245 = vadd.f32 %v242, %v244
        %v246 = vstv %s220
        %v247 = vadd.f32 %v245, %v246
        %v248 = vrcp.pop %v240
        %v249 = vmul.f32 %v247, %v248
        %v250 = vstv %s222
        %v251 = vmul.f32 %v209, %v250
        %v252 = vstv %s224
        %v253 = vmul.f32 %v207, %v252
        %v254 = vadd.f32 %v251, %v253
        %v255 = vstv %s226
        %v256 = vadd.f32 %v254, %v255
        %v257 = vmul.f32 %v256, %v248
        %v258 = vsub.f32 255.0, %v257
        %v259 = vmul.f32 %v258, 0.003921569
        %v260 = vsel %vm210, %v249, 0.0
        %v261 = vsel %vm210, %v259, 0.0
        %v262 = vmul.f32 %v261, %v261
        %v263 = vmul.f32 %v262, %v261
        %v264 = vmul.f32 %v262, %v262
        %v265 = vmul.f32 %v260, %v261
        %v266 = vmul.f32 %v260, %v262
        %v267 = vld [vmem:[%s169] sm:$0xff]
        %v268 = vmul.f32 %v267, %v267
        %v269 = vmul.f32 %v268, %v214
        %270 = vst [vmem:[%s187] sm:$0xff] %v269
        %v271 = vmul.f32 %v269, %v269
        %v272 = vmul.f32 %v271, %v260
        %v273 = vrot.slane %v271, 4
        %v274 = vadd.f32 %v271, %v273
        %v275 = vrot.slane %v274, 2
        %v276 = vadd.f32 %v274, %v275
        %v277 = vrot.slane %v276, 1
        %v278 = vadd.f32 %v276, %v277
        %v279 = vmul.f32 %v271, %v261
        %v280 = vrot.slane %v279, 4
        %v281 = vadd.f32 %v279, %v280
        %v282 = vrot.slane %v281, 2
        %v283 = vadd.f32 %v281, %v282
        %v284 = vrot.slane %v283, 1
        %v285 = vadd.f32 %v283, %v284
        %v286 = vmul.f32 %v271, %v262
        %v287 = vrot.slane %v286, 4
        %v288 = vadd.f32 %v286, %v287
        %v289 = vrot.slane %v288, 2
        %v290 = vadd.f32 %v288, %v289
        %v291 = vrot.slane %v290, 1
        %v292 = vadd.f32 %v290, %v291
        %v293 = vmul.f32 %v271, %v263
        %v294 = vrot.slane %v293, 4
        %v295 = vadd.f32 %v293, %v294
        %v296 = vrot.slane %v295, 2
        %v297 = vadd.f32 %v295, %v296
        %v298 = vrot.slane %v297, 1
        %v299 = vadd.f32 %v297, %v298
        %v300 = vmul.f32 %v271, %v264
        %v301 = vrot.slane %v300, 4
        %v302 = vadd.f32 %v300, %v301
        %v303 = vrot.slane %v302, 2
        %v304 = vadd.f32 %v302, %v303
        %v305 = vrot.slane %v304, 1
        %v306 = vadd.f32 %v304, %v305
        %v307 = vrot.slane %v272, 4
        %v308 = vadd.f32 %v272, %v307
        %v309 = vrot.slane %v308, 2
        %v310 = vadd.f32 %v308, %v309
        %v311 = vrot.slane %v310, 1
        %v312 = vadd.f32 %v310, %v311
        %v313 = vmul.f32 %v271, %v265
        %v314 = vrot.slane %v313, 4
        %v315 = vadd.f32 %v313, %v314
        %v316 = vrot.slane %v315, 2
        %v317 = vadd.f32 %v315, %v316
        %v318 = vrot.slane %v317, 1
        %v319 = vadd.f32 %v317, %v318
        %v320 = vmul.f32 %v271, %v266
        %v321 = vrot.slane %v320, 4
        %v322 = vadd.f32 %v320, %v321
        %v323 = vrot.slane %v322, 2
        %v324 = vadd.f32 %v322, %v323
        %v325 = vrot.slane %v324, 1
        %v326 = vadd.f32 %v324, %v325
        %vm327 = vcmask 1040384
        %v328 = vsel %vm327, %v278, %v285
        %vm329 = vcmask 1041408
        %v330 = vsel %vm329, %v328, %v292
        %vm331 = vcmask 1042432
        %v332 = vsel %vm331, %v330, %v299
        %vm333 = vcmask 1043456
        %v334 = vsel %vm333, %v332, %v306
        %vm335 = vcmask 1044480
        %v336 = vsel %vm335, %v334, %v312
        %vm337 = vcmask 1045504
        %v338 = vsel %vm337, %v336, %v319
        %vm339 = vcmask 1046528
        %v340 = vsel %vm339, %v338, %v326
        %p341 = scmp.eq.s32.totalorder %s33, 0
        // Predicated region
        $region29: #{tpu_custom_call.1} parent=23 // pred_check
          %p342 = pneg %p341
        $region30: #{tpu_custom_call.1} parent=23 // pred_check_branch
          %344 = sbr.rel (%p342) target = $region32
        $region31: #{tpu_custom_call.1} parent=23 // pred_region
          %345 = vst [vmem:[%s194] sm:$0xff] %v340
        $region32: #{tpu_custom_call.1} parent=23 // pred_fallthru
          _
        %p346 = scmp.gt.s32.totalorder %s33, 0
        // Predicated region
        $region33: #{tpu_custom_call.1} parent=23 // pred_check
          %p347 = pneg %p346
        $region34: #{tpu_custom_call.1} parent=23 // pred_check_branch
          %349 = sbr.rel (%p347) target = $region36
        $region35: #{tpu_custom_call.1} parent=23 // pred_region
          %v350 = vld [vmem:[%s194] sm:$0xff]
          %v351 = vadd.f32 %v350, %v340
          %352 = vst [vmem:[%s194] sm:$0xff] %v351
        $region36: #{tpu_custom_call.1} parent=23 // pred_fallthru
          _
        %s353 = scalar_lea.vmem %s169, 8 [#allocation4]
        %v354 = vld [vmem:[%s353] sm:$0xff]
        %v355 = vmul.f32 %v354, %v354
        %v356 = vmul.f32 %v355, %v214
        %s357 = scalar_lea.vmem %s187, 8 [#allocation7]
        %358 = vst [vmem:[%s357] sm:$0xff] %v356
        %v359 = vmul.f32 %v356, %v356
        %v360 = vmul.f32 %v359, %v260
        %v361 = vrot.slane %v359, 4
        %v362 = vadd.f32 %v359, %v361
        %v363 = vrot.slane %v362, 2
        %v364 = vadd.f32 %v362, %v363
        %v365 = vrot.slane %v364, 1
        %v366 = vadd.f32 %v364, %v365
        %v367 = vmul.f32 %v359, %v261
        %v368 = vrot.slane %v367, 4
        %v369 = vadd.f32 %v367, %v368
        %v370 = vrot.slane %v369, 2
        %v371 = vadd.f32 %v369, %v370
        %v372 = vrot.slane %v371, 1
        %v373 = vadd.f32 %v371, %v372
        %v374 = vmul.f32 %v359, %v262
        %v375 = vrot.slane %v374, 4
        %v376 = vadd.f32 %v374, %v375
        %v377 = vrot.slane %v376, 2
        %v378 = vadd.f32 %v376, %v377
        %v379 = vrot.slane %v378, 1
        %v380 = vadd.f32 %v378, %v379
        %v381 = vmul.f32 %v359, %v263
        %v382 = vrot.slane %v381, 4
        %v383 = vadd.f32 %v381, %v382
        %v384 = vrot.slane %v383, 2
        %v385 = vadd.f32 %v383, %v384
        %v386 = vrot.slane %v385, 1
        %v387 = vadd.f32 %v385, %v386
        %v388 = vmul.f32 %v359, %v264
        %v389 = vrot.slane %v388, 4
        %v390 = vadd.f32 %v388, %v389
        %v391 = vrot.slane %v390, 2
        %v392 = vadd.f32 %v390, %v391
        %v393 = vrot.slane %v392, 1
        %v394 = vadd.f32 %v392, %v393
        %v395 = vrot.slane %v360, 4
        %v396 = vadd.f32 %v360, %v395
        %v397 = vrot.slane %v396, 2
        %v398 = vadd.f32 %v396, %v397
        %v399 = vrot.slane %v398, 1
        %v400 = vadd.f32 %v398, %v399
        %v401 = vmul.f32 %v359, %v265
        %v402 = vrot.slane %v401, 4
        %v403 = vadd.f32 %v401, %v402
        %v404 = vrot.slane %v403, 2
        %v405 = vadd.f32 %v403, %v404
        %v406 = vrot.slane %v405, 1
        %v407 = vadd.f32 %v405, %v406
        %v408 = vmul.f32 %v359, %v266
        %v409 = vrot.slane %v408, 4
        %v410 = vadd.f32 %v408, %v409
        %v411 = vrot.slane %v410, 2
        %v412 = vadd.f32 %v410, %v411
        %v413 = vrot.slane %v412, 1
        %v414 = vadd.f32 %v412, %v413
        %v415 = vsel %vm327, %v366, %v373
        %v416 = vsel %vm329, %v415, %v380
        %v417 = vsel %vm331, %v416, %v387
        %v418 = vsel %vm333, %v417, %v394
        %v419 = vsel %vm335, %v418, %v400
        %v420 = vsel %vm337, %v419, %v407
        %v421 = vsel %vm339, %v420, %v414
        // Predicated region
        $region37: #{tpu_custom_call.1} parent=23 // pred_check
          %p422 = pneg %p341
        $region38: #{tpu_custom_call.1} parent=23 // pred_check_branch
          %424 = sbr.rel (%p422) target = $region40
        $region39: #{tpu_custom_call.1} parent=23 // pred_region
          %s425 = scalar_lea.vmem %s194, 8 [#allocation8]
          %426 = vst [vmem:[%s425] sm:$0xff] %v421
        $region40: #{tpu_custom_call.1} parent=23 // pred_fallthru
          _
        // Predicated region
        $region41: #{tpu_custom_call.1} parent=23 // pred_check
          %p427 = pneg %p346
        $region42: #{tpu_custom_call.1} parent=23 // pred_check_branch
          %429 = sbr.rel (%p427) target = $region44
        $region43: #{tpu_custom_call.1} parent=23 // pred_region
          %s430 = scalar_lea.vmem %s194, 8 [#allocation8]
          %v431 = vld [vmem:[%s430] sm:$0xff]
          %v432 = vadd.f32 %v431, %v421
          %433 = vst [vmem:[%s430] sm:$0xff] %v432
        $region44: #{tpu_custom_call.1} parent=23 // pred_fallthru
          _
        %s434 = sand.u32 %s78, 1
        %s435 = scalar_lea.sflag [#allocation6], %s434
        %s436 = sand.u32 %s78, 1
        %s437 = smul.addr %s436, 16
        %s438 = scalar_lea.vmem [#allocation7], %s437
        %s439 = sand.u32 %s104, 1
        %s440 = scalar_lea.sflag [#allocation9], %s439
        %s441 = sand.u32 %s104, 1
        %s442 = smul.addr %s441, 16
        %s443 = scalar_lea.vmem [#allocation8], %s442
        // Predicated region
        $region45: #{tpu_custom_call.1} parent=23 // pred_check
          %p444 = pneg %p88
        $region46: #{tpu_custom_call.1} parent=23 // pred_check_branch
          %446 = sbr.rel (%p444) target = $region48
        $region47: #{tpu_custom_call.1} parent=23 // pred_region
          %s448 = ssub.s32 256, 256
          %449 = vsyncadd %s435, %s448
          %s450 = smul.addr %s32, 2
          %s451 = sadd.s32 %s33, %s450
          %s452 = smul.addr %s451, 128
          %s453 = scalar_lea.hbm %s2, %s452
          %s454 = sshll.u32 %s438, 4
          %s455 = int_to_ptr.vmem [resolvable:$true] %s454
          %460 = dma.vmem_to_hbm [thread:$0]  %s455, 256, %s453, %s435, 128, 128, 8
        $region48: #{tpu_custom_call.1} parent=23 // pred_fallthru
          _
        // Predicated region
        $region49: #{tpu_custom_call.1} parent=23 // pred_check
          %p461 = pneg %p114
        $region50: #{tpu_custom_call.1} parent=23 // pred_check_branch
          %463 = sbr.rel (%p461) target = $region52
        $region51: #{tpu_custom_call.1} parent=23 // pred_region
          %s465 = ssub.s32 256, 256
          %466 = vsyncadd %s440, %s465
          %s467 = smul.addr %s32, 2
          %s468 = smul.addr %s467, 128
          %s469 = scalar_lea.hbm %s3, %s468
          %s470 = sshll.u32 %s443, 4
          %s471 = int_to_ptr.vmem [resolvable:$true] %s470
          %476 = dma.vmem_to_hbm [thread:$0]  %s471, 256, %s469, %s440, 128, 128, 8
        $region52: #{tpu_custom_call.1} parent=23 // pred_fallthru
          _
      $region24: #{tpu_custom_call.1} parent=5 // pred_fallthru
        _
      %p477 = scmp.le.s32.totalorder 2, %s23
      // Predicated region
      $region53: #{tpu_custom_call.1} parent=5 // pred_check
        %p478 = pneg %p477
      $region54: #{tpu_custom_call.1} parent=5 // pred_check_branch
        %480 = sbr.rel (%p478) target = $region56
      $region55: #{tpu_custom_call.1} parent=5 // pred_region
        %s481 = ssub.s32 %s23, 2
        // Predicated region
        $region57: #{tpu_custom_call.1} parent=55 // pred_check
          %p482 = pneg %p94
        $region58: #{tpu_custom_call.1} parent=55 // pred_check_branch
          %484 = sbr.rel (%p482) target = $region60
        $region59: #{tpu_custom_call.1} parent=55 // pred_region
          %s485 = sand.u32 %s79, 1
          %s486 = scalar_lea.sflag [#allocation6], %s485
          %s487 = sand.u32 %s79, 1
          %s488 = smul.addr %s487, 16
          %s489 = scalar_lea.vmem [#allocation7], %s488
          %490 = dma.done %s486, 256
        $region60: #{tpu_custom_call.1} parent=55 // pred_fallthru
          _
        // Predicated region
        $region61: #{tpu_custom_call.1} parent=55 // pred_check
          %p491 = pneg %p120
        $region62: #{tpu_custom_call.1} parent=55 // pred_check_branch
          %493 = sbr.rel (%p491) target = $region64
        $region63: #{tpu_custom_call.1} parent=55 // pred_region
          %s494 = sand.u32 %s105, 1
          %s495 = scalar_lea.sflag [#allocation9], %s494
          %s496 = sand.u32 %s105, 1
          %s497 = smul.addr %s496, 16
          %s498 = scalar_lea.vmem [#allocation8], %s497
          %499 = dma.done %s495, 256
        $region64: #{tpu_custom_call.1} parent=55 // pred_fallthru
          _
      $region56: #{tpu_custom_call.1} parent=5 // pred_fallthru
        _
    $region6: #{tpu_custom_call.1} parent=1 // loop_footer
      %s27 = sadd.s32 1, %s23
    $region7: #{tpu_custom_call.1} parent=1 // loop_footer_branch
      %22 = sbr.rel target = $region3
    $region8: #{tpu_custom_call.1} parent=1 // loop_exit
      _
    %500 = vsyncpa [#allocation5], 1
    %s501 = scalar_lea.sflag [#allocation5], 1
    %502 = vsyncpa %s501, 1
    %503 = vsyncpa [#allocation6], 1
    %s504 = scalar_lea.sflag [#allocation6], 1
    %505 = vsyncpa %s504, 1
    %506 = vsyncpa [#allocation9], 1
    %s507 = scalar_lea.sflag [#allocation9], 1
    %508 = vsyncpa %s507, 1

</llo_original>
